<compile_context>
chip_gen: v5e
topology: v5e:2x2
jax: 0.10.0
libtpu: 0.0.40
codegen_flags: <defaults>
</compile_context>

<pallas_src>
import functools

import jax
import jax.numpy as jnp
from jax.experimental import pallas as pl
from jax.experimental.pallas import tpu as pltpu


def _cmp_swap(a, b):
    """Compare-exchange: (min, max). Unused halves are dead-code-eliminated."""
    return jnp.minimum(a, b), jnp.maximum(a, b)


def _median_of_9(p):
    """Devillard/Paeth 19-compare-exchange median-of-9 selection network.

    Equivalent to median(max of column mins, median of column medians,
    min of column maxes) after sorting the three 3-element columns.
    """
    p = list(p)

    def s(i, j):
        p[i], p[j] = _cmp_swap(p[i], p[j])

    s(1, 2); s(4, 5); s(7, 8)
    s(0, 1); s(3, 4); s(6, 7)
    s(1, 2); s(4, 5); s(7, 8)
    s(0, 3); s(5, 8); s(4, 7)
    s(3, 6); s(1, 4); s(2, 5)
    s(4, 7); s(4, 2); s(6, 4)
    s(4, 2)
    return p[4]


def _median_select(vals):
    """Lower median via a partial selection network (general odd k*k taps).

    Only bubbles the (m+1) smallest values into place instead of fully
    sorting; dead min/max results are DCE'd by Mosaic.
    """
    vals = list(vals)
    n = len(vals)
    m = (n - 1) // 2  # lower-median index == torch.median for odd counts
    for i in range(m + 1):
        for j in range(n - 1, i, -1):
            vals[j - 1], vals[j] = _cmp_swap(vals[j - 1], vals[j])
    return vals[m]


def _median_blur_kernel(x_ref, o_ref, *, kh, kw, th, w, reduce_method):
    """One (TP, TH + kh - 1, W + kw - 1) halo'd row-tile -> (TP, TH, W) output."""
    x = x_ref[...]
    # Single up-cast per tile (v5e VPU has no bf16 ALUs; avoids per-op casts).
    if x.dtype != jnp.float32:
        x = x.astype(jnp.float32)

    # Binary "patch extraction" grouped conv == kh*kw statically shifted taps.
    taps = [x[:, dy:dy + th, dx:dx + w] for dy in range(kh) for dx in range(kw)]

    k = kh * kw
    if reduce_method == 'median':
        res = _median_of_9(taps) if k == 9 else _median_select(taps)
    elif reduce_method == 'mean':
        acc = taps[0]
        for t in taps[1:]:
            acc = acc + t
        res = acc * (1.0 / k)
    else:
        raise ValueError(f"unsupported reduce_method: {reduce_method}")

    o_ref[...] = res.astype(o_ref.dtype)


def median_blur(x, kernel_size=(3, 3), reduce_method='median'):
    """Pallas TPU MedianBlur.forward (NCHW, zero padding, lower median)."""
    assert x.ndim == 4, "expect BxCxHxW"
    b, c, h, w = x.shape
    kh, kw = kernel_size
    # Even kernel sizes would under-pad and break the original module too.
    assert kh % 2 == 1 and kw % 2 == 1, "kernel_size must be odd"
    ph, pw = (kh - 1) // 2, (kw - 1) // 2
    n = b * c
    wp = w + 2 * pw

    # ---- tile selection -----------------------------------------------------
    # ~512 KiB per input block keeps the ~10 live (TP, TH, W) f32 temporaries
    # of the median network comfortably inside VMEM next to the double-buffered
    # input/output blocks, on every generation (incl. v7x's 64 MiB VMEM).
    budget_bytes = 512 * 1024
    row_cap = max(8, ((budget_bytes // (wp * 4)) // 8) * 8)
    th_cap = min(128, row_cap)                 # rows/tile (vreg-pressure cap)
    th = h if h <= th_cap else th_cap
    n_th = int(pl.cdiv(h, th))
    h_pad = n_th * th
    th_in = th + 2 * ph

    # Batch several planes per grid step (amortize ~0.35us/step + tiny DMAs
    # for small images like 16x16).
    tp = max(1, min(n, budget_bytes // (th_in * wp * 4)))
    n_pb = int(pl.cdiv(n, tp))
    n_pad = n_pb * tp

    # ---- zero pad + halo-duplicated row tiles (one fused XLA pass) ----------
    xf = x.reshape(n, h, w)
    xp = jnp.pad(xf, ((0, n_pad - n), (ph, ph + (h_pad - h)), (pw, pw)))
    if n_th > 1:
        xt = jnp.stack(
            [xp[:, t * th: t * th + th_in, :] for t in range(n_th)], axis=1)
    else:
        xt = xp[:, None, :, :]
    # xt: (n_pad, n_th, th_in, wp). Overlapping tiles let the grid use plain
    # Blocked indexing (no in-kernel halo DMA) while still auto-pipelining.
    # TODO(synk): when W < 128, pack several padded planes along the lane axis
    # (zero gaps prevent window cross-talk) for lane-dense vst stores.

    kernel = functools.partial(
        _median_blur_kernel, kh=kh, kw=kw, th=th, w=w,
        reduce_method=reduce_method)

    out = pl.pallas_call(
        kernel,
        out_shape=jax.ShapeDtypeStruct((n_pad, n_th, th, w), x.dtype),
        grid=(n_pb, n_th),
        in_specs=[pl.BlockSpec((tp, None, th_in, wp),
                               lambda p, t: (p, t, 0, 0))],
        out_specs=pl.BlockSpec((tp, None, th, w),
                               lambda p, t: (p, t, 0, 0)),
        compiler_params=pltpu.CompilerParams(
            # every tile is independent -> shardable over v7x's 2 TensorCores
            dimension_semantics=("parallel", "parallel"),
            vmem_limit_bytes=32 * 1024 * 1024),
    )(xt)

    out = out.reshape(n_pad, h_pad, w)[:n, :h, :]
    return out.reshape(b, c, h, w)


def _median_blur_ref(x, kernel_size=(3, 3), reduce_method='median'):
    """Pure-JAX reference mirroring the PyTorch module semantics."""
    b, c, h, w = x.shape
    kh, kw = kernel_size
    ph, pw = (kh - 1) // 2, (kw - 1) // 2
    xp = jnp.pad(x, ((0, 0), (0, 0), (ph, ph), (pw, pw)))
    feats = jnp.stack(
        [xp[:, :, dy:dy + h, dx:dx + w] for dy in range(kh) for dx in range(kw)],
        axis=2,
    )  # (B, C, kh*kw, H, W)
    if reduce_method == 'median':
        k = kh * kw
        return jnp.sort(feats, axis=2)[:, :, (k - 1) // 2]  # lower median
    return jnp.mean(feats, axis=2)


if __name__ == "__main__":
    key = jax.random.PRNGKey(0)
    x = jax.random.uniform(key, (2, 4, 16, 16), dtype=jnp.float32)

    y = median_blur(x, kernel_size=(3, 3), reduce_method='median')
    y = jax.block_until_ready(y)
    y_ref = _median_blur_ref(x, kernel_size=(3, 3), reduce_method='median')
    assert y.shape == x.shape
    assert jnp.allclose(y, y_ref, atol=1e-6, rtol=1e-6), "median mismatch"

    y2 = median_blur(x, kernel_size=(3, 3), reduce_method='mean')
    y2 = jax.block_until_ready(y2)
    y2_ref = _median_blur_ref(x, kernel_size=(3, 3), reduce_method='mean')
    assert jnp.allclose(y2, y2_ref, atol=1e-5, rtol=1e-5), "mean mismatch"

    print("KERNEL_OK")
</pallas_src>

<mosaic_0001>
module attributes {stable_mosaic.version = 11 : i64} {
  func.func @_median_blur_kernel(%arg0: i32, %arg1: i32, %arg2: memref<8x1x18x18xf32, #tpu.memory_space<vmem>>, %arg3: memref<8x1x16x16xf32, #tpu.memory_space<vmem>>) attributes {dimension_semantics = [#tpu.dimension_semantics<parallel>, #tpu.dimension_semantics<parallel>], iteration_bounds = array<i64: 1, 1>, scalar_prefetch = 0 : i64, scratch_operands = 0 : i64, tpu.core_type = #tpu.core_type<tc>, window_params = [{transform_indices = @transform_0, window_bounds = array<i64: 8, 1, 18, 18>}, {transform_indices = @transform_1, window_bounds = array<i64: 8, 1, 16, 16>}]} {
    %c0 = arith.constant 0 : index
    %c0_0 = arith.constant 0 : index
    %c0_1 = arith.constant 0 : index
    %c0_2 = arith.constant 0 : index
    %0 = vector.load %arg2[%c0, %c0_0, %c0_1, %c0_2] : memref<8x1x18x18xf32, #tpu.memory_space<vmem>>, vector<8x1x18x18xf32>
    %1 = vector.shape_cast %0 : vector<8x1x18x18xf32> to vector<8x18x18xf32>
    %2 = vector.extract_strided_slice %1 {offsets = [0, 0, 0], sizes = [8, 16, 16], strides = [1, 1, 1]} : vector<8x18x18xf32> to vector<8x16x16xf32>
    %3 = vector.extract_strided_slice %1 {offsets = [0, 0, 1], sizes = [8, 16, 16], strides = [1, 1, 1]} : vector<8x18x18xf32> to vector<8x16x16xf32>
    %4 = vector.extract_strided_slice %1 {offsets = [0, 0, 2], sizes = [8, 16, 16], strides = [1, 1, 1]} : vector<8x18x18xf32> to vector<8x16x16xf32>
    %5 = vector.extract_strided_slice %1 {offsets = [0, 1, 0], sizes = [8, 16, 16], strides = [1, 1, 1]} : vector<8x18x18xf32> to vector<8x16x16xf32>
    %6 = vector.extract_strided_slice %1 {offsets = [0, 1, 1], sizes = [8, 16, 16], strides = [1, 1, 1]} : vector<8x18x18xf32> to vector<8x16x16xf32>
    %7 = vector.extract_strided_slice %1 {offsets = [0, 1, 2], sizes = [8, 16, 16], strides = [1, 1, 1]} : vector<8x18x18xf32> to vector<8x16x16xf32>
    %8 = vector.extract_strided_slice %1 {offsets = [0, 2, 0], sizes = [8, 16, 16], strides = [1, 1, 1]} : vector<8x18x18xf32> to vector<8x16x16xf32>
    %9 = vector.extract_strided_slice %1 {offsets = [0, 2, 1], sizes = [8, 16, 16], strides = [1, 1, 1]} : vector<8x18x18xf32> to vector<8x16x16xf32>
    %10 = vector.extract_strided_slice %1 {offsets = [0, 2, 2], sizes = [8, 16, 16], strides = [1, 1, 1]} : vector<8x18x18xf32> to vector<8x16x16xf32>
    %11 = arith.minimumf %3, %4 : vector<8x16x16xf32>
    %12 = arith.maximumf %3, %4 : vector<8x16x16xf32>
    %13 = arith.minimumf %6, %7 : vector<8x16x16xf32>
    %14 = arith.maximumf %6, %7 : vector<8x16x16xf32>
    %15 = arith.minimumf %9, %10 : vector<8x16x16xf32>
    %16 = arith.maximumf %9, %10 : vector<8x16x16xf32>
    %17 = arith.minimumf %2, %11 : vector<8x16x16xf32>
    %18 = arith.maximumf %2, %11 : vector<8x16x16xf32>
    %19 = arith.minimumf %5, %13 : vector<8x16x16xf32>
    %20 = arith.maximumf %5, %13 : vector<8x16x16xf32>
    %21 = arith.minimumf %8, %15 : vector<8x16x16xf32>
    %22 = arith.maximumf %8, %15 : vector<8x16x16xf32>
    %23 = arith.minimumf %18, %12 : vector<8x16x16xf32>
    %24 = arith.maximumf %18, %12 : vector<8x16x16xf32>
    %25 = arith.minimumf %20, %14 : vector<8x16x16xf32>
    %26 = arith.maximumf %20, %14 : vector<8x16x16xf32>
    %27 = arith.minimumf %22, %16 : vector<8x16x16xf32>
    %28 = arith.maximumf %22, %16 : vector<8x16x16xf32>
    %29 = arith.maximumf %17, %19 : vector<8x16x16xf32>
    %30 = arith.minimumf %26, %28 : vector<8x16x16xf32>
    %31 = arith.minimumf %25, %27 : vector<8x16x16xf32>
    %32 = arith.maximumf %25, %27 : vector<8x16x16xf32>
    %33 = arith.maximumf %29, %21 : vector<8x16x16xf32>
    %34 = arith.maximumf %23, %31 : vector<8x16x16xf32>
    %35 = arith.minimumf %24, %30 : vector<8x16x16xf32>
    %36 = arith.minimumf %34, %32 : vector<8x16x16xf32>
    %37 = arith.minimumf %36, %35 : vector<8x16x16xf32>
    %38 = arith.maximumf %36, %35 : vector<8x16x16xf32>
    %39 = arith.maximumf %33, %37 : vector<8x16x16xf32>
    %40 = arith.minimumf %39, %38 : vector<8x16x16xf32>
    %c0_3 = arith.constant 0 : index
    %c0_4 = arith.constant 0 : index
    %c0_5 = arith.constant 0 : index
    %c0_6 = arith.constant 0 : index
    %41 = vector.load %arg3[%c0_3, %c0_4, %c0_5, %c0_6] : memref<8x1x16x16xf32, #tpu.memory_space<vmem>>, vector<8x1x16x16xf32>
    %42 = vector.shape_cast %41 : vector<8x1x16x16xf32> to vector<8x16x16xf32>
    %43 = vector.shape_cast %40 : vector<8x16x16xf32> to vector<8x1x16x16xf32>
    tpu.vector_store %arg3[%c0_3, %c0_4, %c0_5, %c0_6], %43 {strides = array<i32>} : memref<8x1x16x16xf32, #tpu.memory_space<vmem>>, vector<8x1x16x16xf32>,
    return
  }
  func.func @transform_0(%arg0: i32, %arg1: i32) -> (i32, i32, i32, i32) {
    %c0_i32 = arith.constant 0 : i32
    %c0_i32_0 = arith.constant 0 : i32
    %c0_i32_1 = arith.constant 0 : i32
    return %arg0, %arg1, %c0_i32, %c0_i32_0 : i32, i32, i32, i32
  }
  func.func @transform_1(%arg0: i32, %arg1: i32) -> (i32, i32, i32, i32) {
    %c0_i32 = arith.constant 0 : i32
    %c0_i32_0 = arith.constant 0 : i32
    %c0_i32_1 = arith.constant 0 : i32
    return %arg0, %arg1, %c0_i32, %c0_i32_0 : i32, i32, i32, i32
  }
}

</mosaic_0001>

<llo_original>
// kernel: tpu_custom_call.1
$region0: #{tpu_custom_call.1}
  #allocation0 [shape = 'u32[]', space=smem, size = 0x4, offset = 0x4, fixed_abs, tag = 'smem constant byte address 0x4 - core index']
  #allocation1 [shape = 'u32[72,128]{1,0:T(1,128)}', space=vmem, size = 0x9000, scoped, tag = 'internal scratch']
  %s0 = inlined_call_operand.vmem [shape: f32[8,1,18,18], index: 0, kind: input, shape index: {}]
  %s1 = inlined_call_operand.hbm [shape: f32[8,1,16,16], index: 1, kind: output, shape index: {}]
  %s2 = sld [smem:[#allocation0]]
  $region14: #{tpu_custom_call.1} parent=0
    _
  %s4 = ssub.s32 1, %s2
  %s5 = scalar_select 0, %s4, %s2
  $region1: #{tpu_custom_call.1} parent=0
    #allocation2 [shape = 'u8[65536]{0}', space=vmem, size = 0x10000, scoped, tag = 'output window, operand 0, single buffered']
    #allocation3 [shape = 's32[1]{0}', space=sflag, size = 0x4, scoped, tag = 'scoped memory for tpu_custom_call.1']
    %6 = vsyncpa [#allocation3], 0
    // Predicated region
    $region2: #{tpu_custom_call.1} parent=1 // pred_check
      _
    $region3: #{tpu_custom_call.1} parent=1 // pred_check_branch
      %8 = sbr.rel (0) target = $region5
    $region4: #{tpu_custom_call.1} parent=1 // pred_region
      _
    $region5: #{tpu_custom_call.1} parent=1 // pred_fallthru
      _
    %v9 = vld [vmem:[%s0] sm:$0xff]
    %v10 = vld [vmem:[%s0 + $0x8] sm:$0xff]
    %v11 = vld [vmem:[%s0 + $0x10] sm:$0x3]
    %v12 = vld [vmem:[%s0 + $0x18] sm:$0xff]
    %v13 = vld [vmem:[%s0 + $0x20] sm:$0xff]
    %v14 = vld [vmem:[%s0 + $0x28] sm:$0x3]
    %v15 = vld [vmem:[%s0 + $0x30] sm:$0xff]
    %v16 = vld [vmem:[%s0 + $0x38] sm:$0xff]
    %v17 = vld [vmem:[%s0 + $0x40] sm:$0x3]
    %v18 = vld [vmem:[%s0 + $0x48] sm:$0xff]
    %v19 = vld [vmem:[%s0 + $0x50] sm:$0xff]
    %v20 = vld [vmem:[%s0 + $0x58] sm:$0x3]
    %v21 = vld [vmem:[%s0 + $0x60] sm:$0xff]
    %v22 = vld [vmem:[%s0 + $0x68] sm:$0xff]
    %v23 = vld [vmem:[%s0 + $0x70] sm:$0x3]
    %v24 = vld [vmem:[%s0 + $0x78] sm:$0xff]
    %v25 = vld [vmem:[%s0 + $0x80] sm:$0xff]
    %v26 = vld [vmem:[%s0 + $0x88] sm:$0x3]
    %v27 = vld [vmem:[%s0 + $0x90] sm:$0xff]
    %v28 = vld [vmem:[%s0 + $0x98] sm:$0xff]
    %v29 = vld [vmem:[%s0 + $0xa0] sm:$0x3]
    %v30 = vld [vmem:[%s0 + $0xa8] sm:$0xff]
    %v31 = vld [vmem:[%s0 + $0xb0] sm:$0xff]
    %v32 = vld [vmem:[%s0 + $0xb8] sm:$0x3]
    %49 = vrot.lane.b32.xlu0 %v9, 127
    %v50 = vpop.permute.xlu0 %49
    %51 = vrot.lane.b32.xlu0 %v10, 127
    %v52 = vpop.permute.xlu0 %51
    %53 = vrot.lane.b32.xlu0 %v12, 127
    %v54 = vpop.permute.xlu0 %53
    %55 = vrot.lane.b32.xlu0 %v13, 127
    %v56 = vpop.permute.xlu0 %55
    %57 = vrot.lane.b32.xlu0 %v15, 127
    %v58 = vpop.permute.xlu0 %57
    %59 = vrot.lane.b32.xlu0 %v16, 127
    %v60 = vpop.permute.xlu0 %59
    %61 = vrot.lane.b32.xlu0 %v18, 127
    %v62 = vpop.permute.xlu0 %61
    %63 = vrot.lane.b32.xlu0 %v19, 127
    %v64 = vpop.permute.xlu0 %63
    %65 = vrot.lane.b32.xlu0 %v21, 127
    %v66 = vpop.permute.xlu0 %65
    %67 = vrot.lane.b32.xlu0 %v22, 127
    %v68 = vpop.permute.xlu0 %67
    %69 = vrot.lane.b32.xlu0 %v24, 127
    %v70 = vpop.permute.xlu0 %69
    %71 = vrot.lane.b32.xlu0 %v25, 127
    %v72 = vpop.permute.xlu0 %71
    %73 = vrot.lane.b32.xlu0 %v27, 127
    %v74 = vpop.permute.xlu0 %73
    %75 = vrot.lane.b32.xlu0 %v28, 127
    %v76 = vpop.permute.xlu0 %75
    %77 = vrot.lane.b32.xlu0 %v30, 127
    %v78 = vpop.permute.xlu0 %77
    %79 = vrot.lane.b32.xlu0 %v31, 127
    %v80 = vpop.permute.xlu0 %79
    %v97 = vmin.f32 %v9, %v50
    %v98 = vmin.f32 %v10, %v52
    %v99 = vmin.f32 %v12, %v54
    %v100 = vmin.f32 %v13, %v56
    %v101 = vmin.f32 %v15, %v58
    %v102 = vmin.f32 %v16, %v60
    %v103 = vmin.f32 %v18, %v62
    %v104 = vmin.f32 %v19, %v64
    %v105 = vmin.f32 %v21, %v66
    %v106 = vmin.f32 %v22, %v68
    %v107 = vmin.f32 %v24, %v70
    %v108 = vmin.f32 %v25, %v72
    %v109 = vmin.f32 %v27, %v74
    %v110 = vmin.f32 %v28, %v76
    %v111 = vmin.f32 %v30, %v78
    %v112 = vmin.f32 %v31, %v80
    %v113 = vmax.f32 %v9, %v50
    %v114 = vmax.f32 %v10, %v52
    %v115 = vmax.f32 %v12, %v54
    %v116 = vmax.f32 %v13, %v56
    %v117 = vmax.f32 %v15, %v58
    %v118 = vmax.f32 %v16, %v60
    %v119 = vmax.f32 %v18, %v62
    %v120 = vmax.f32 %v19, %v64
    %v121 = vmax.f32 %v21, %v66
    %v122 = vmax.f32 %v22, %v68
    %v123 = vmax.f32 %v24, %v70
    %v124 = vmax.f32 %v25, %v72
    %v125 = vmax.f32 %v27, %v74
    %v126 = vmax.f32 %v28, %v76
    %v127 = vmax.f32 %v30, %v78
    %v128 = vmax.f32 %v31, %v80
    %137 = vrot.lane.b32.xlu0 %v11, 127
    %v138 = vpop.permute.xlu0 %137
    %139 = vrot.lane.b32.xlu0 %v14, 127
    %v140 = vpop.permute.xlu0 %139
    %141 = vrot.lane.b32.xlu0 %v17, 127
    %v142 = vpop.permute.xlu0 %141
    %143 = vrot.lane.b32.xlu0 %v20, 127
    %v144 = vpop.permute.xlu0 %143
    %145 = vrot.lane.b32.xlu0 %v23, 127
    %v146 = vpop.permute.xlu0 %145
    %147 = vrot.lane.b32.xlu0 %v26, 127
    %v148 = vpop.permute.xlu0 %147
    %149 = vrot.lane.b32.xlu0 %v29, 127
    %v150 = vpop.permute.xlu0 %149
    %151 = vrot.lane.b32.xlu0 %v32, 127
    %v152 = vpop.permute.xlu0 %151
    %v161 = vmin.f32 %v11, %v138
    %v162 = vmin.f32 %v14, %v140
    %v163 = vmin.f32 %v17, %v142
    %v164 = vmin.f32 %v20, %v144
    %v165 = vmin.f32 %v23, %v146
    %v166 = vmin.f32 %v26, %v148
    %v167 = vmin.f32 %v29, %v150
    %v168 = vmin.f32 %v32, %v152
    %v169 = vmax.f32 %v11, %v138
    %v170 = vmax.f32 %v14, %v140
    %v171 = vmax.f32 %v17, %v142
    %v172 = vmax.f32 %v20, %v144
    %v173 = vmax.f32 %v23, %v146
    %v174 = vmax.f32 %v26, %v148
    %v175 = vmax.f32 %v29, %v150
    %v176 = vmax.f32 %v32, %v152
    %193 = vrot.lane.b32.xlu0 %v97, 127
    %v194 = vpop.permute.xlu0 %193
    %195 = vrot.lane.b32.xlu0 %v98, 127
    %v196 = vpop.permute.xlu0 %195
    %197 = vrot.lane.b32.xlu0 %v99, 127
    %v198 = vpop.permute.xlu0 %197
    %199 = vrot.lane.b32.xlu0 %v100, 127
    %v200 = vpop.permute.xlu0 %199
    %201 = vrot.lane.b32.xlu0 %v101, 127
    %v202 = vpop.permute.xlu0 %201
    %203 = vrot.lane.b32.xlu0 %v102, 127
    %v204 = vpop.permute.xlu0 %203
    %205 = vrot.lane.b32.xlu0 %v103, 127
    %v206 = vpop.permute.xlu0 %205
    %207 = vrot.lane.b32.xlu0 %v104, 127
    %v208 = vpop.permute.xlu0 %207
    %209 = vrot.lane.b32.xlu0 %v105, 127
    %v210 = vpop.permute.xlu0 %209
    %211 = vrot.lane.b32.xlu0 %v106, 127
    %v212 = vpop.permute.xlu0 %211
    %213 = vrot.lane.b32.xlu0 %v107, 127
    %v214 = vpop.permute.xlu0 %213
    %215 = vrot.lane.b32.xlu0 %v108, 127
    %v216 = vpop.permute.xlu0 %215
    %217 = vrot.lane.b32.xlu0 %v109, 127
    %v218 = vpop.permute.xlu0 %217
    %219 = vrot.lane.b32.xlu0 %v110, 127
    %v220 = vpop.permute.xlu0 %219
    %221 = vrot.lane.b32.xlu0 %v111, 127
    %v222 = vpop.permute.xlu0 %221
    %223 = vrot.lane.b32.xlu0 %v112, 127
    %v224 = vpop.permute.xlu0 %223
    %v241 = vmin.f32 %v9, %v194
    %v242 = vmin.f32 %v10, %v196
    %v243 = vmin.f32 %v12, %v198
    %v244 = vmin.f32 %v13, %v200
    %v245 = vmin.f32 %v15, %v202
    %v246 = vmin.f32 %v16, %v204
    %v247 = vmin.f32 %v18, %v206
    %v248 = vmin.f32 %v19, %v208
    %v249 = vmin.f32 %v21, %v210
    %v250 = vmin.f32 %v22, %v212
    %v251 = vmin.f32 %v24, %v214
    %v252 = vmin.f32 %v25, %v216
    %v253 = vmin.f32 %v27, %v218
    %v254 = vmin.f32 %v28, %v220
    %v255 = vmin.f32 %v30, %v222
    %v256 = vmin.f32 %v31, %v224
    %v257 = vmax.f32 %v9, %v194
    %v258 = vmax.f32 %v10, %v196
    %v259 = vmax.f32 %v12, %v198
    %v260 = vmax.f32 %v13, %v200
    %v261 = vmax.f32 %v15, %v202
    %v262 = vmax.f32 %v16, %v204
    %v263 = vmax.f32 %v18, %v206
    %v264 = vmax.f32 %v19, %v208
    %v265 = vmax.f32 %v21, %v210
    %v266 = vmax.f32 %v22, %v212
    %v267 = vmax.f32 %v24, %v214
    %v268 = vmax.f32 %v25, %v216
    %v269 = vmax.f32 %v27, %v218
    %v270 = vmax.f32 %v28, %v220
    %v271 = vmax.f32 %v30, %v222
    %v272 = vmax.f32 %v31, %v224
    %281 = vrot.lane.b32.xlu0 %v161, 127
    %v282 = vpop.permute.xlu0 %281
    %283 = vrot.lane.b32.xlu0 %v162, 127
    %v284 = vpop.permute.xlu0 %283
    %285 = vrot.lane.b32.xlu0 %v163, 127
    %v286 = vpop.permute.xlu0 %285
    %287 = vrot.lane.b32.xlu0 %v164, 127
    %v288 = vpop.permute.xlu0 %287
    %289 = vrot.lane.b32.xlu0 %v165, 127
    %v290 = vpop.permute.xlu0 %289
    %291 = vrot.lane.b32.xlu0 %v166, 127
    %v292 = vpop.permute.xlu0 %291
    %293 = vrot.lane.b32.xlu0 %v167, 127
    %v294 = vpop.permute.xlu0 %293
    %295 = vrot.lane.b32.xlu0 %v168, 127
    %v296 = vpop.permute.xlu0 %295
    %v305 = vmin.f32 %v11, %v282
    %v306 = vmin.f32 %v14, %v284
    %v307 = vmin.f32 %v17, %v286
    %v308 = vmin.f32 %v20, %v288
    %v309 = vmin.f32 %v23, %v290
    %v310 = vmin.f32 %v26, %v292
    %v311 = vmin.f32 %v29, %v294
    %v312 = vmin.f32 %v32, %v296
    %v313 = vmax.f32 %v11, %v282
    %v314 = vmax.f32 %v14, %v284
    %v315 = vmax.f32 %v17, %v286
    %v316 = vmax.f32 %v20, %v288
    %v317 = vmax.f32 %v23, %v290
    %v318 = vmax.f32 %v26, %v292
    %v319 = vmax.f32 %v29, %v294
    %v320 = vmax.f32 %v32, %v296
    %337 = vrot.lane.b32.xlu0 %v113, 127
    %v338 = vpop.permute.xlu0 %337
    %339 = vrot.lane.b32.xlu0 %v114, 127
    %v340 = vpop.permute.xlu0 %339
    %341 = vrot.lane.b32.xlu0 %v115, 127
    %v342 = vpop.permute.xlu0 %341
    %343 = vrot.lane.b32.xlu0 %v116, 127
    %v344 = vpop.permute.xlu0 %343
    %345 = vrot.lane.b32.xlu0 %v117, 127
    %v346 = vpop.permute.xlu0 %345
    %347 = vrot.lane.b32.xlu0 %v118, 127
    %v348 = vpop.permute.xlu0 %347
    %349 = vrot.lane.b32.xlu0 %v119, 127
    %v350 = vpop.permute.xlu0 %349
    %351 = vrot.lane.b32.xlu0 %v120, 127
    %v352 = vpop.permute.xlu0 %351
    %353 = vrot.lane.b32.xlu0 %v121, 127
    %v354 = vpop.permute.xlu0 %353
    %355 = vrot.lane.b32.xlu0 %v122, 127
    %v356 = vpop.permute.xlu0 %355
    %357 = vrot.lane.b32.xlu0 %v123, 127
    %v358 = vpop.permute.xlu0 %357
    %359 = vrot.lane.b32.xlu0 %v124, 127
    %v360 = vpop.permute.xlu0 %359
    %361 = vrot.lane.b32.xlu0 %v125, 127
    %v362 = vpop.permute.xlu0 %361
    %363 = vrot.lane.b32.xlu0 %v126, 127
    %v364 = vpop.permute.xlu0 %363
    %365 = vrot.lane.b32.xlu0 %v127, 127
    %v366 = vpop.permute.xlu0 %365
    %367 = vrot.lane.b32.xlu0 %v128, 127
    %v368 = vpop.permute.xlu0 %367
    %v385 = vmin.f32 %v257, %v338
    %v386 = vmin.f32 %v258, %v340
    %v387 = vmin.f32 %v259, %v342
    %v388 = vmin.f32 %v260, %v344
    %v389 = vmin.f32 %v261, %v346
    %v390 = vmin.f32 %v262, %v348
    %v391 = vmin.f32 %v263, %v350
    %v392 = vmin.f32 %v264, %v352
    %v393 = vmin.f32 %v265, %v354
    %v394 = vmin.f32 %v266, %v356
    %v395 = vmin.f32 %v267, %v358
    %v396 = vmin.f32 %v268, %v360
    %v397 = vmin.f32 %v269, %v362
    %v398 = vmin.f32 %v270, %v364
    %v399 = vmin.f32 %v271, %v366
    %v400 = vmin.f32 %v272, %v368
    %v401 = vmax.f32 %v257, %v338
    %v402 = vmax.f32 %v258, %v340
    %v403 = vmax.f32 %v259, %v342
    %v404 = vmax.f32 %v260, %v344
    %v405 = vmax.f32 %v261, %v346
    %v406 = vmax.f32 %v262, %v348
    %v407 = vmax.f32 %v263, %v350
    %v408 = vmax.f32 %v264, %v352
    %v409 = vmax.f32 %v265, %v354
    %v410 = vmax.f32 %v266, %v356
    %v411 = vmax.f32 %v267, %v358
    %v412 = vmax.f32 %v268, %v360
    %v413 = vmax.f32 %v269, %v362
    %v414 = vmax.f32 %v270, %v364
    %v415 = vmax.f32 %v271, %v366
    %v416 = vmax.f32 %v272, %v368
    %425 = vrot.lane.b32.xlu0 %v169, 127
    %v426 = vpop.permute.xlu0 %425
    %427 = vrot.lane.b32.xlu0 %v170, 127
    %v428 = vpop.permute.xlu0 %427
    %429 = vrot.lane.b32.xlu0 %v171, 127
    %v430 = vpop.permute.xlu0 %429
    %431 = vrot.lane.b32.xlu0 %v172, 127
    %v432 = vpop.permute.xlu0 %431
    %433 = vrot.lane.b32.xlu0 %v173, 127
    %v434 = vpop.permute.xlu0 %433
    %435 = vrot.lane.b32.xlu0 %v174, 127
    %v436 = vpop.permute.xlu0 %435
    %437 = vrot.lane.b32.xlu0 %v175, 127
    %v438 = vpop.permute.xlu0 %437
    %439 = vrot.lane.b32.xlu0 %v176, 127
    %v440 = vpop.permute.xlu0 %439
    %v449 = vmin.f32 %v313, %v426
    %v450 = vmin.f32 %v314, %v428
    %v451 = vmin.f32 %v315, %v430
    %v452 = vmin.f32 %v316, %v432
    %v453 = vmin.f32 %v317, %v434
    %v454 = vmin.f32 %v318, %v436
    %v455 = vmin.f32 %v319, %v438
    %v456 = vmin.f32 %v320, %v440
    %v457 = vmax.f32 %v313, %v426
    %v458 = vmax.f32 %v314, %v428
    %v459 = vmax.f32 %v315, %v430
    %v460 = vmax.f32 %v316, %v432
    %v461 = vmax.f32 %v317, %v434
    %v462 = vmax.f32 %v318, %v436
    %v463 = vmax.f32 %v319, %v438
    %v464 = vmax.f32 %v320, %v440
    %vm489 = vcmask 1046528
    %v490 = vrot.slane %v241, 1
    %v491 = vrot.slane %v242, 1
    %v492 = vsel %vm489, %v490, %v491
    %v493 = vrot.slane %v305, 1
    %v494 = vsel %vm489, %v491, %v493
    %v495 = vrot.slane %v243, 1
    %v496 = vrot.slane %v244, 1
    %v497 = vsel %vm489, %v495, %v496
    %v498 = vrot.slane %v306, 1
    %v499 = vsel %vm489, %v496, %v498
    %v500 = vrot.slane %v245, 1
    %v501 = vrot.slane %v246, 1
    %v502 = vsel %vm489, %v500, %v501
    %v503 = vrot.slane %v307, 1
    %v504 = vsel %vm489, %v501, %v503
    %v505 = vrot.slane %v247, 1
    %v506 = vrot.slane %v248, 1
    %v507 = vsel %vm489, %v505, %v506
    %v508 = vrot.slane %v308, 1
    %v509 = vsel %vm489, %v506, %v508
    %v510 = vrot.slane %v249, 1
    %v511 = vrot.slane %v250, 1
    %v512 = vsel %vm489, %v510, %v511
    %v513 = vrot.slane %v309, 1
    %v514 = vsel %vm489, %v511, %v513
    %v515 = vrot.slane %v251, 1
    %v516 = vrot.slane %v252, 1
    %v517 = vsel %vm489, %v515, %v516
    %v518 = vrot.slane %v310, 1
    %v519 = vsel %vm489, %v516, %v518
    %v520 = vrot.slane %v253, 1
    %v521 = vrot.slane %v254, 1
    %v522 = vsel %vm489, %v520, %v521
    %v523 = vrot.slane %v311, 1
    %v524 = vsel %vm489, %v521, %v523
    %v525 = vrot.slane %v255, 1
    %v526 = vrot.slane %v256, 1
    %v527 = vsel %vm489, %v525, %v526
    %v528 = vrot.slane %v312, 1
    %v529 = vsel %vm489, %v526, %v528
    %v546 = vmax.f32 %v241, %v492
    %v547 = vmax.f32 %v242, %v494
    %v548 = vmax.f32 %v243, %v497
    %v549 = vmax.f32 %v244, %v499
    %v550 = vmax.f32 %v245, %v502
    %v551 = vmax.f32 %v246, %v504
    %v552 = vmax.f32 %v247, %v507
    %v553 = vmax.f32 %v248, %v509
    %v554 = vmax.f32 %v249, %v512
    %v555 = vmax.f32 %v250, %v514
    %v556 = vmax.f32 %v251, %v517
    %v557 = vmax.f32 %v252, %v519
    %v558 = vmax.f32 %v253, %v522
    %v559 = vmax.f32 %v254, %v524
    %v560 = vmax.f32 %v255, %v527
    %v561 = vmax.f32 %v256, %v529
    %v586 = vrot.slane %v401, 1
    %v587 = vrot.slane %v402, 1
    %v588 = vsel %vm489, %v586, %v587
    %v589 = vrot.slane %v457, 1
    %v590 = vsel %vm489, %v587, %v589
    %v591 = vrot.slane %v403, 1
    %v592 = vrot.slane %v404, 1
    %v593 = vsel %vm489, %v591, %v592
    %v594 = vrot.slane %v458, 1
    %v595 = vsel %vm489, %v592, %v594
    %v596 = vrot.slane %v405, 1
    %v597 = vrot.slane %v406, 1
    %v598 = vsel %vm489, %v596, %v597
    %v599 = vrot.slane %v459, 1
    %v600 = vsel %vm489, %v597, %v599
    %v601 = vrot.slane %v407, 1
    %v602 = vrot.slane %v408, 1
    %v603 = vsel %vm489, %v601, %v602
    %v604 = vrot.slane %v460, 1
    %v605 = vsel %vm489, %v602, %v604
    %v606 = vrot.slane %v409, 1
    %v607 = vrot.slane %v410, 1
    %v608 = vsel %vm489, %v606, %v607
    %v609 = vrot.slane %v461, 1
    %v610 = vsel %vm489, %v607, %v609
    %v611 = vrot.slane %v411, 1
    %v612 = vrot.slane %v412, 1
    %v613 = vsel %vm489, %v611, %v612
    %v614 = vrot.slane %v462, 1
    %v615 = vsel %vm489, %v612, %v614
    %v616 = vrot.slane %v413, 1
    %v617 = vrot.slane %v414, 1
    %v618 = vsel %vm489, %v616, %v617
    %v619 = vrot.slane %v463, 1
    %v620 = vsel %vm489, %v617, %v619
    %v621 = vrot.slane %v415, 1
    %v622 = vrot.slane %v416, 1
    %v623 = vsel %vm489, %v621, %v622
    %v624 = vrot.slane %v464, 1
    %v625 = vsel %vm489, %v622, %v624
    %v650 = vmin.f32 %v401, %v588
    %v651 = vmin.f32 %v402, %v590
    %v652 = vmin.f32 %v457, %v589
    %v653 = vmin.f32 %v403, %v593
    %v654 = vmin.f32 %v404, %v595
    %v655 = vmin.f32 %v458, %v594
    %v656 = vmin.f32 %v405, %v598
    %v657 = vmin.f32 %v406, %v600
    %v658 = vmin.f32 %v459, %v599
    %v659 = vmin.f32 %v407, %v603
    %v660 = vmin.f32 %v408, %v605
    %v661 = vmin.f32 %v460, %v604
    %v662 = vmin.f32 %v409, %v608
    %v663 = vmin.f32 %v410, %v610
    %v664 = vmin.f32 %v461, %v609
    %v665 = vmin.f32 %v411, %v613
    %v666 = vmin.f32 %v412, %v615
    %v667 = vmin.f32 %v462, %v614
    %v668 = vmin.f32 %v413, %v618
    %v669 = vmin.f32 %v414, %v620
    %v670 = vmin.f32 %v463, %v619
    %v671 = vmin.f32 %v415, %v623
    %v672 = vmin.f32 %v416, %v625
    %v673 = vmin.f32 %v464, %v624
    %v698 = vrot.slane %v385, 1
    %v699 = vrot.slane %v386, 1
    %v700 = vsel %vm489, %v698, %v699
    %v701 = vrot.slane %v449, 1
    %v702 = vsel %vm489, %v699, %v701
    %v703 = vrot.slane %v387, 1
    %v704 = vrot.slane %v388, 1
    %v705 = vsel %vm489, %v703, %v704
    %v706 = vrot.slane %v450, 1
    %v707 = vsel %vm489, %v704, %v706
    %v708 = vrot.slane %v389, 1
    %v709 = vrot.slane %v390, 1
    %v710 = vsel %vm489, %v708, %v709
    %v711 = vrot.slane %v451, 1
    %v712 = vsel %vm489, %v709, %v711
    %v713 = vrot.slane %v391, 1
    %v714 = vrot.slane %v392, 1
    %v715 = vsel %vm489, %v713, %v714
    %v716 = vrot.slane %v452, 1
    %v717 = vsel %vm489, %v714, %v716
    %v718 = vrot.slane %v393, 1
    %v719 = vrot.slane %v394, 1
    %v720 = vsel %vm489, %v718, %v719
    %v721 = vrot.slane %v453, 1
    %v722 = vsel %vm489, %v719, %v721
    %v723 = vrot.slane %v395, 1
    %v724 = vrot.slane %v396, 1
    %v725 = vsel %vm489, %v723, %v724
    %v726 = vrot.slane %v454, 1
    %v727 = vsel %vm489, %v724, %v726
    %v728 = vrot.slane %v397, 1
    %v729 = vrot.slane %v398, 1
    %v730 = vsel %vm489, %v728, %v729
    %v731 = vrot.slane %v455, 1
    %v732 = vsel %vm489, %v729, %v731
    %v733 = vrot.slane %v399, 1
    %v734 = vrot.slane %v400, 1
    %v735 = vsel %vm489, %v733, %v734
    %v736 = vrot.slane %v456, 1
    %v737 = vsel %vm489, %v734, %v736
    %v762 = vmin.f32 %v385, %v700
    %v763 = vmin.f32 %v386, %v702
    %v764 = vmin.f32 %v449, %v701
    %v765 = vmin.f32 %v387, %v705
    %v766 = vmin.f32 %v388, %v707
    %v767 = vmin.f32 %v450, %v706
    %v768 = vmin.f32 %v389, %v710
    %v769 = vmin.f32 %v390, %v712
    %v770 = vmin.f32 %v451, %v711
    %v771 = vmin.f32 %v391, %v715
    %v772 = vmin.f32 %v392, %v717
    %v773 = vmin.f32 %v452, %v716
    %v774 = vmin.f32 %v393, %v720
    %v775 = vmin.f32 %v394, %v722
    %v776 = vmin.f32 %v453, %v721
    %v777 = vmin.f32 %v395, %v725
    %v778 = vmin.f32 %v396, %v727
    %v779 = vmin.f32 %v454, %v726
    %v780 = vmin.f32 %v397, %v730
    %v781 = vmin.f32 %v398, %v732
    %v782 = vmin.f32 %v455, %v731
    %v783 = vmin.f32 %v399, %v735
    %v784 = vmin.f32 %v400, %v737
    %v785 = vmin.f32 %v456, %v736
    %v786 = vmax.f32 %v385, %v700
    %v787 = vmax.f32 %v386, %v702
    %v788 = vmax.f32 %v449, %v701
    %v789 = vmax.f32 %v387, %v705
    %v790 = vmax.f32 %v388, %v707
    %v791 = vmax.f32 %v450, %v706
    %v792 = vmax.f32 %v389, %v710
    %v793 = vmax.f32 %v390, %v712
    %v794 = vmax.f32 %v451, %v711
    %v795 = vmax.f32 %v391, %v715
    %v796 = vmax.f32 %v392, %v717
    %v797 = vmax.f32 %v452, %v716
    %v798 = vmax.f32 %v393, %v720
    %v799 = vmax.f32 %v394, %v722
    %v800 = vmax.f32 %v453, %v721
    %v801 = vmax.f32 %v395, %v725
    %v802 = vmax.f32 %v396, %v727
    %v803 = vmax.f32 %v454, %v726
    %v804 = vmax.f32 %v397, %v730
    %v805 = vmax.f32 %v398, %v732
    %v806 = vmax.f32 %v455, %v731
    %v807 = vmax.f32 %v399, %v735
    %v808 = vmax.f32 %v400, %v737
    %v809 = vmax.f32 %v456, %v736
    %vm810 = vcmask 1045504
    %v811 = vrot.slane %v241, 2
    %v812 = vrot.slane %v242, 2
    %v813 = vsel %vm810, %v811, %v812
    %v814 = vrot.slane %v305, 2
    %v815 = vsel %vm810, %v812, %v814
    %v816 = vrot.slane %v243, 2
    %v817 = vrot.slane %v244, 2
    %v818 = vsel %vm810, %v816, %v817
    %v819 = vrot.slane %v306, 2
    %v820 = vsel %vm810, %v817, %v819
    %v821 = vrot.slane %v245, 2
    %v822 = vrot.slane %v246, 2
    %v823 = vsel %vm810, %v821, %v822
    %v824 = vrot.slane %v307, 2
    %v825 = vsel %vm810, %v822, %v824
    %v826 = vrot.slane %v247, 2
    %v827 = vrot.slane %v248, 2
    %v828 = vsel %vm810, %v826, %v827
    %v829 = vrot.slane %v308, 2
    %v830 = vsel %vm810, %v827, %v829
    %v831 = vrot.slane %v249, 2
    %v832 = vrot.slane %v250, 2
    %v833 = vsel %vm810, %v831, %v832
    %v834 = vrot.slane %v309, 2
    %v835 = vsel %vm810, %v832, %v834
    %v836 = vrot.slane %v251, 2
    %v837 = vrot.slane %v252, 2
    %v838 = vsel %vm810, %v836, %v837
    %v839 = vrot.slane %v310, 2
    %v840 = vsel %vm810, %v837, %v839
    %v841 = vrot.slane %v253, 2
    %v842 = vrot.slane %v254, 2
    %v843 = vsel %vm810, %v841, %v842
    %v844 = vrot.slane %v311, 2
    %v845 = vsel %vm810, %v842, %v844
    %v846 = vrot.slane %v255, 2
    %v847 = vrot.slane %v256, 2
    %v848 = vsel %vm810, %v846, %v847
    %v849 = vrot.slane %v312, 2
    %v850 = vsel %vm810, %v847, %v849
    %v867 = vmax.f32 %v546, %v813
    %v868 = vmax.f32 %v547, %v815
    %v869 = vmax.f32 %v548, %v818
    %v870 = vmax.f32 %v549, %v820
    %v871 = vmax.f32 %v550, %v823
    %v872 = vmax.f32 %v551, %v825
    %v873 = vmax.f32 %v552, %v828
    %v874 = vmax.f32 %v553, %v830
    %v875 = vmax.f32 %v554, %v833
    %v876 = vmax.f32 %v555, %v835
    %v877 = vmax.f32 %v556, %v838
    %v878 = vmax.f32 %v557, %v840
    %v879 = vmax.f32 %v558, %v843
    %v880 = vmax.f32 %v559, %v845
    %v881 = vmax.f32 %v560, %v848
    %v882 = vmax.f32 %v561, %v850
    %v907 = vrot.slane %v762, 1
    %v908 = vrot.slane %v763, 1
    %v909 = vsel %vm489, %v907, %v908
    %v910 = vrot.slane %v764, 1
    %v911 = vsel %vm489, %v908, %v910
    %v912 = vrot.slane %v765, 1
    %v913 = vrot.slane %v766, 1
    %v914 = vsel %vm489, %v912, %v913
    %v915 = vrot.slane %v767, 1
    %v916 = vsel %vm489, %v913, %v915
    %v917 = vrot.slane %v768, 1
    %v918 = vrot.slane %v769, 1
    %v919 = vsel %vm489, %v917, %v918
    %v920 = vrot.slane %v770, 1
    %v921 = vsel %vm489, %v918, %v920
    %v922 = vrot.slane %v771, 1
    %v923 = vrot.slane %v772, 1
    %v924 = vsel %vm489, %v922, %v923
    %v925 = vrot.slane %v773, 1
    %v926 = vsel %vm489, %v923, %v925
    %v927 = vrot.slane %v774, 1
    %v928 = vrot.slane %v775, 1
    %v929 = vsel %vm489, %v927, %v928
    %v930 = vrot.slane %v776, 1
    %v931 = vsel %vm489, %v928, %v930
    %v932 = vrot.slane %v777, 1
    %v933 = vrot.slane %v778, 1
    %v934 = vsel %vm489, %v932, %v933
    %v935 = vrot.slane %v779, 1
    %v936 = vsel %vm489, %v933, %v935
    %v937 = vrot.slane %v780, 1
    %v938 = vrot.slane %v781, 1
    %v939 = vsel %vm489, %v937, %v938
    %v940 = vrot.slane %v782, 1
    %v941 = vsel %vm489, %v938, %v940
    %v942 = vrot.slane %v783, 1
    %v943 = vrot.slane %v784, 1
    %v944 = vsel %vm489, %v942, %v943
    %v945 = vrot.slane %v785, 1
    %v946 = vsel %vm489, %v943, %v945
    %v963 = vmax.f32 %v385, %v909
    %v964 = vmax.f32 %v386, %v911
    %v965 = vmax.f32 %v387, %v914
    %v966 = vmax.f32 %v388, %v916
    %v967 = vmax.f32 %v389, %v919
    %v968 = vmax.f32 %v390, %v921
    %v969 = vmax.f32 %v391, %v924
    %v970 = vmax.f32 %v392, %v926
    %v971 = vmax.f32 %v393, %v929
    %v972 = vmax.f32 %v394, %v931
    %v973 = vmax.f32 %v395, %v934
    %v974 = vmax.f32 %v396, %v936
    %v975 = vmax.f32 %v397, %v939
    %v976 = vmax.f32 %v398, %v941
    %v977 = vmax.f32 %v399, %v944
    %v978 = vmax.f32 %v400, %v946
    %v1003 = vrot.slane %v650, 1
    %v1004 = vrot.slane %v651, 1
    %v1005 = vsel %vm489, %v1003, %v1004
    %v1006 = vrot.slane %v652, 1
    %v1007 = vsel %vm489, %v1004, %v1006
    %v1008 = vrot.slane %v653, 1
    %v1009 = vrot.slane %v654, 1
    %v1010 = vsel %vm489, %v1008, %v1009
    %v1011 = vrot.slane %v655, 1
    %v1012 = vsel %vm489, %v1009, %v1011
    %v1013 = vrot.slane %v656, 1
    %v1014 = vrot.slane %v657, 1
    %v1015 = vsel %vm489, %v1013, %v1014
    %v1016 = vrot.slane %v658, 1
    %v1017 = vsel %vm489, %v1014, %v1016
    %v1018 = vrot.slane %v659, 1
    %v1019 = vrot.slane %v660, 1
    %v1020 = vsel %vm489, %v1018, %v1019
    %v1021 = vrot.slane %v661, 1
    %v1022 = vsel %vm489, %v1019, %v1021
    %v1023 = vrot.slane %v662, 1
    %v1024 = vrot.slane %v663, 1
    %v1025 = vsel %vm489, %v1023, %v1024
    %v1026 = vrot.slane %v664, 1
    %v1027 = vsel %vm489, %v1024, %v1026
    %v1028 = vrot.slane %v665, 1
    %v1029 = vrot.slane %v666, 1
    %v1030 = vsel %vm489, %v1028, %v1029
    %v1031 = vrot.slane %v667, 1
    %v1032 = vsel %vm489, %v1029, %v1031
    %v1033 = vrot.slane %v668, 1
    %v1034 = vrot.slane %v669, 1
    %v1035 = vsel %vm489, %v1033, %v1034
    %v1036 = vrot.slane %v670, 1
    %v1037 = vsel %vm489, %v1034, %v1036
    %v1038 = vrot.slane %v671, 1
    %v1039 = vrot.slane %v672, 1
    %v1040 = vsel %vm489, %v1038, %v1039
    %v1041 = vrot.slane %v673, 1
    %v1042 = vsel %vm489, %v1039, %v1041
    %v1059 = vmin.f32 %v401, %v1005
    %v1060 = vmin.f32 %v402, %v1007
    %v1061 = vmin.f32 %v403, %v1010
    %v1062 = vmin.f32 %v404, %v1012
    %v1063 = vmin.f32 %v405, %v1015
    %v1064 = vmin.f32 %v406, %v1017
    %v1065 = vmin.f32 %v407, %v1020
    %v1066 = vmin.f32 %v408, %v1022
    %v1067 = vmin.f32 %v409, %v1025
    %v1068 = vmin.f32 %v410, %v1027
    %v1069 = vmin.f32 %v411, %v1030
    %v1070 = vmin.f32 %v412, %v1032
    %v1071 = vmin.f32 %v413, %v1035
    %v1072 = vmin.f32 %v414, %v1037
    %v1073 = vmin.f32 %v415, %v1040
    %v1074 = vmin.f32 %v416, %v1042
    %v1099 = vrot.slane %v786, 1
    %v1100 = vrot.slane %v787, 1
    %v1101 = vsel %vm489, %v1099, %v1100
    %v1102 = vrot.slane %v788, 1
    %v1103 = vsel %vm489, %v1100, %v1102
    %v1104 = vrot.slane %v789, 1
    %v1105 = vrot.slane %v790, 1
    %v1106 = vsel %vm489, %v1104, %v1105
    %v1107 = vrot.slane %v791, 1
    %v1108 = vsel %vm489, %v1105, %v1107
    %v1109 = vrot.slane %v792, 1
    %v1110 = vrot.slane %v793, 1
    %v1111 = vsel %vm489, %v1109, %v1110
    %v1112 = vrot.slane %v794, 1
    %v1113 = vsel %vm489, %v1110, %v1112
    %v1114 = vrot.slane %v795, 1
    %v1115 = vrot.slane %v796, 1
    %v1116 = vsel %vm489, %v1114, %v1115
    %v1117 = vrot.slane %v797, 1
    %v1118 = vsel %vm489, %v1115, %v1117
    %v1119 = vrot.slane %v798, 1
    %v1120 = vrot.slane %v799, 1
    %v1121 = vsel %vm489, %v1119, %v1120
    %v1122 = vrot.slane %v800, 1
    %v1123 = vsel %vm489, %v1120, %v1122
    %v1124 = vrot.slane %v801, 1
    %v1125 = vrot.slane %v802, 1
    %v1126 = vsel %vm489, %v1124, %v1125
    %v1127 = vrot.slane %v803, 1
    %v1128 = vsel %vm489, %v1125, %v1127
    %v1129 = vrot.slane %v804, 1
    %v1130 = vrot.slane %v805, 1
    %v1131 = vsel %vm489, %v1129, %v1130
    %v1132 = vrot.slane %v806, 1
    %v1133 = vsel %vm489, %v1130, %v1132
    %v1134 = vrot.slane %v807, 1
    %v1135 = vrot.slane %v808, 1
    %v1136 = vsel %vm489, %v1134, %v1135
    %v1137 = vrot.slane %v809, 1
    %v1138 = vsel %vm489, %v1135, %v1137
    %v1155 = vmin.f32 %v963, %v1101
    %v1156 = vmin.f32 %v964, %v1103
    %v1157 = vmin.f32 %v965, %v1106
    %v1158 = vmin.f32 %v966, %v1108
    %v1159 = vmin.f32 %v967, %v1111
    %v1160 = vmin.f32 %v968, %v1113
    %v1161 = vmin.f32 %v969, %v1116
    %v1162 = vmin.f32 %v970, %v1118
    %v1163 = vmin.f32 %v971, %v1121
    %v1164 = vmin.f32 %v972, %v1123
    %v1165 = vmin.f32 %v973, %v1126
    %v1166 = vmin.f32 %v974, %v1128
    %v1167 = vmin.f32 %v975, %v1131
    %v1168 = vmin.f32 %v976, %v1133
    %v1169 = vmin.f32 %v977, %v1136
    %v1170 = vmin.f32 %v978, %v1138
    %v1171 = vmin.f32 %v1155, %v1059
    %v1172 = vmin.f32 %v1156, %v1060
    %v1173 = vmin.f32 %v1157, %v1061
    %v1174 = vmin.f32 %v1158, %v1062
    %v1175 = vmin.f32 %v1159, %v1063
    %v1176 = vmin.f32 %v1160, %v1064
    %v1177 = vmin.f32 %v1161, %v1065
    %v1178 = vmin.f32 %v1162, %v1066
    %v1179 = vmin.f32 %v1163, %v1067
    %v1180 = vmin.f32 %v1164, %v1068
    %v1181 = vmin.f32 %v1165, %v1069
    %v1182 = vmin.f32 %v1166, %v1070
    %v1183 = vmin.f32 %v1167, %v1071
    %v1184 = vmin.f32 %v1168, %v1072
    %v1185 = vmin.f32 %v1169, %v1073
    %v1186 = vmin.f32 %v1170, %v1074
    %v1187 = vmax.f32 %v1155, %v1059
    %v1188 = vmax.f32 %v1156, %v1060
    %v1189 = vmax.f32 %v1157, %v1061
    %v1190 = vmax.f32 %v1158, %v1062
    %v1191 = vmax.f32 %v1159, %v1063
    %v1192 = vmax.f32 %v1160, %v1064
    %v1193 = vmax.f32 %v1161, %v1065
    %v1194 = vmax.f32 %v1162, %v1066
    %v1195 = vmax.f32 %v1163, %v1067
    %v1196 = vmax.f32 %v1164, %v1068
    %v1197 = vmax.f32 %v1165, %v1069
    %v1198 = vmax.f32 %v1166, %v1070
    %v1199 = vmax.f32 %v1167, %v1071
    %v1200 = vmax.f32 %v1168, %v1072
    %v1201 = vmax.f32 %v1169, %v1073
    %v1202 = vmax.f32 %v1170, %v1074
    %v1203 = vmax.f32 %v867, %v1171
    %v1204 = vmax.f32 %v868, %v1172
    %v1205 = vmax.f32 %v869, %v1173
    %v1206 = vmax.f32 %v870, %v1174
    %v1207 = vmax.f32 %v871, %v1175
    %v1208 = vmax.f32 %v872, %v1176
    %v1209 = vmax.f32 %v873, %v1177
    %v1210 = vmax.f32 %v874, %v1178
    %v1211 = vmax.f32 %v875, %v1179
    %v1212 = vmax.f32 %v876, %v1180
    %v1213 = vmax.f32 %v877, %v1181
    %v1214 = vmax.f32 %v878, %v1182
    %v1215 = vmax.f32 %v879, %v1183
    %v1216 = vmax.f32 %v880, %v1184
    %v1217 = vmax.f32 %v881, %v1185
    %v1218 = vmax.f32 %v882, %v1186
    %v1219 = vmin.f32 %v1203, %v1187
    %v1220 = vmin.f32 %v1204, %v1188
    %v1221 = vmin.f32 %v1205, %v1189
    %v1222 = vmin.f32 %v1206, %v1190
    %v1223 = vmin.f32 %v1207, %v1191
    %v1224 = vmin.f32 %v1208, %v1192
    %v1225 = vmin.f32 %v1209, %v1193
    %v1226 = vmin.f32 %v1210, %v1194
    %v1227 = vmin.f32 %v1211, %v1195
    %v1228 = vmin.f32 %v1212, %v1196
    %v1229 = vmin.f32 %v1213, %v1197
    %v1230 = vmin.f32 %v1214, %v1198
    %v1231 = vmin.f32 %v1215, %v1199
    %v1232 = vmin.f32 %v1216, %v1200
    %v1233 = vmin.f32 %v1217, %v1201
    %v1234 = vmin.f32 %v1218, %v1202
    %vm1235 = vcmask 130048
    %1236 = vst.msk [vmem:[#allocation2] sm:$0xff] %vm1235, %v1219
    %1237 = vst.msk [vmem:[#allocation2 + $0x8] sm:$0xff] %vm1235, %v1220
    %1238 = vst.msk [vmem:[#allocation2 + $0x10] sm:$0xff] %vm1235, %v1221
    %1239 = vst.msk [vmem:[#allocation2 + $0x18] sm:$0xff] %vm1235, %v1222
    %1240 = vst.msk [vmem:[#allocation2 + $0x20] sm:$0xff] %vm1235, %v1223
    %1241 = vst.msk [vmem:[#allocation2 + $0x28] sm:$0xff] %vm1235, %v1224
    %1242 = vst.msk [vmem:[#allocation2 + $0x30] sm:$0xff] %vm1235, %v1225
    %1243 = vst.msk [vmem:[#allocation2 + $0x38] sm:$0xff] %vm1235, %v1226
    %1244 = vst.msk [vmem:[#allocation2 + $0x40] sm:$0xff] %vm1235, %v1227
    %1245 = vst.msk [vmem:[#allocation2 + $0x48] sm:$0xff] %vm1235, %v1228
    %1246 = vst.msk [vmem:[#allocation2 + $0x50] sm:$0xff] %vm1235, %v1229
    %1247 = vst.msk [vmem:[#allocation2 + $0x58] sm:$0xff] %vm1235, %v1230
    %1248 = vst.msk [vmem:[#allocation2 + $0x60] sm:$0xff] %vm1235, %v1231
    %1249 = vst.msk [vmem:[#allocation2 + $0x68] sm:$0xff] %vm1235, %v1232
    %1250 = vst.msk [vmem:[#allocation2 + $0x70] sm:$0xff] %vm1235, %v1233
    %1251 = vst.msk [vmem:[#allocation2 + $0x78] sm:$0xff] %vm1235, %v1234
    // Predicated region
    $region6: #{tpu_custom_call.1} parent=1 // pred_check
      _
    $region7: #{tpu_custom_call.1} parent=1 // pred_check_branch
      %1253 = sbr.rel (0) target = $region9
    $region8: #{tpu_custom_call.1} parent=1 // pred_region
      %1255 = vsyncadd [#allocation3], 0
      %s1256 = sshll.u32 [#allocation2], 4
      %s1257 = int_to_ptr.vmem [resolvable:$true] %s1256
      %s1258 = sshll.u32 %s1, 4
      %s1259 = int_to_ptr.hbm [resolvable:$true] %s1258
      %1264 = dma.vmem_to_hbm [thread:$0]  %s1257, 2048, %s1259, [#allocation3], 128, 128, 8
    $region9: #{tpu_custom_call.1} parent=1 // pred_fallthru
      _
    // Predicated region
    $region10: #{tpu_custom_call.1} parent=1 // pred_check
      _
    $region11: #{tpu_custom_call.1} parent=1 // pred_check_branch
      %1266 = sbr.rel (0) target = $region13
    $region12: #{tpu_custom_call.1} parent=1 // pred_region
      %1268 = dma.done [#allocation3], 2048
    $region13: #{tpu_custom_call.1} parent=1 // pred_fallthru
      _
    %1269 = vsyncpa [#allocation3], 1

</llo_original>
